<compile_context>
chip_gen: v6e
topology: v6e:2x2x1
jax: 0.10.0
libtpu: 0.0.40
codegen_flags: <defaults>
</compile_context>

<pallas_src>
import math

import jax
import jax.numpy as jnp
from jax.experimental import pallas as pl
from jax.experimental.pallas import tpu as pltpu


_GELU_COEF = 0.7978845608028654  # sqrt(2 / pi)


def _mlp_kernel(x_ref, w_fc_ref, b_fc_ref, w_proj_ref, b_proj_ref,
                o_ref, acc_ref):
    j = pl.program_id(1)                      # hidden-tile index (reduction)

    @pl.when(j == 0)
    def _():
        acc_ref[...] = jnp.zeros_like(acc_ref)

    # First linear: (tm, C) @ (C, th) -> (tm, th), f32 accumulation on the MXU.
    h = jnp.dot(x_ref[...], w_fc_ref[...],
                preferred_element_type=jnp.float32) + b_fc_ref[...]

    # GELU (tanh approximation; f32 VPU/EUP math).
    # TODO(synk): PyTorch nn.GELU() defaults to the exact erf form; the tanh
    # approximation (GPT-2 style) differs by <~1e-3 absolute.
    h = 0.5 * h * (1.0 + jnp.tanh(_GELU_COEF * (h + 0.044715 * (h * h * h))))

    # Second linear, accumulated over hidden tiles: (tm, th) @ (th, C).
    acc_ref[...] += jnp.dot(h.astype(w_proj_ref.dtype), w_proj_ref[...],
                            preferred_element_type=jnp.float32)

    @pl.when(j == pl.num_programs(1) - 1)
    def _():
        # Output bias added once; dropout is identity at inference (p = 0).
        o_ref[...] = (acc_ref[...] + b_proj_ref[...]).astype(o_ref.dtype)


def _pick_tile(dim, prefs):
    for p in prefs:
        if dim % p == 0:
            return p
    return dim


def mlp_forward(x, w_fc, b_fc, w_proj, b_proj, *, tm=None, th=None):
    """nanoGPT MLP forward.  x: (..., C); returns an array of x's shape/dtype."""
    *lead, C = x.shape
    M = math.prod(lead)
    H = w_fc.shape[1]
    assert w_fc.shape == (C, H) and w_proj.shape == (H, C)

    x2 = x.reshape(M, C)
    b_fc2 = b_fc.reshape(1, H)
    b_proj2 = b_proj.reshape(1, C)

    # Tile choices: biggest divisor that keeps (8,128)-aligned blocks; the
    # fallback (full dim) is always legal since block == array extent.
    if tm is None:
        tm = _pick_tile(M, (512, 256, 128, 64, 32, 16, 8))
    if th is None:
        th = _pick_tile(H, (512, 256, 128))

    grid = (M // tm, H // th)

    out = pl.pallas_call(
        _mlp_kernel,
        out_shape=jax.ShapeDtypeStruct((M, C), x.dtype),
        grid=grid,
        in_specs=[
            pl.BlockSpec((tm, C), lambda i, j: (i, 0)),     # x row tile
            pl.BlockSpec((C, th), lambda i, j: (0, j)),     # w_fc hidden tile
            pl.BlockSpec((1, th), lambda i, j: (0, j)),     # b_fc hidden tile
            pl.BlockSpec((th, C), lambda i, j: (j, 0)),     # w_proj hidden tile
            pl.BlockSpec((1, C), lambda i, j: (0, 0)),      # b_proj (resident)
        ],
        out_specs=pl.BlockSpec((tm, C), lambda i, j: (i, 0)),
        scratch_shapes=[pltpu.VMEM((tm, C), jnp.float32)],
        compiler_params=pltpu.CompilerParams(
            dimension_semantics=("parallel", "arbitrary")),
    )(x2, w_fc, b_fc2, w_proj, b_proj2)

    return out.reshape(x.shape)


def mlp_reference(x, w_fc, b_fc, w_proj, b_proj):
    """Pure-JAX reference mirroring the PyTorch forward (eval mode)."""
    h = jax.nn.gelu(x @ w_fc + b_fc, approximate=True)
    return h @ w_proj + b_proj


if __name__ == "__main__":
    B, T, C = 2, 8, 32            # batch, seq, n_embd  (hidden = 4*C = 128)

    key = jax.random.PRNGKey(0)
    kx, kw1, kb1, kw2, kb2 = jax.random.split(key, 5)

    x = jax.random.normal(kx, (B, T, C), dtype=jnp.float32)
    w_fc = 0.02 * jax.random.normal(kw1, (C, 4 * C), dtype=jnp.float32)
    b_fc = 0.01 * jax.random.normal(kb1, (4 * C,), dtype=jnp.float32)
    w_proj = 0.02 * jax.random.normal(kw2, (4 * C, C), dtype=jnp.float32)
    b_proj = 0.01 * jax.random.normal(kb2, (C,), dtype=jnp.float32)

    out = mlp_forward(x, w_fc, b_fc, w_proj, b_proj)
    out = jax.block_until_ready(out)

    ref = mlp_reference(x, w_fc, b_fc, w_proj, b_proj)
    assert out.shape == (B, T, C)
    assert jnp.allclose(out, ref, atol=2e-4, rtol=2e-4), "mismatch vs reference"

    print("KERNEL_OK")
</pallas_src>

<mosaic_0001>
module attributes {stable_mosaic.version = 11 : i64} {
  func.func @_mlp_kernel(%arg0: i32, %arg1: i32, %arg2: memref<16x32xf32, #tpu.memory_space<vmem>>, %arg3: memref<32x128xf32, #tpu.memory_space<vmem>>, %arg4: memref<1x128xf32, #tpu.memory_space<vmem>>, %arg5: memref<128x32xf32, #tpu.memory_space<vmem>>, %arg6: memref<1x32xf32, #tpu.memory_space<vmem>>, %arg7: memref<16x32xf32, #tpu.memory_space<vmem>>, %arg8: memref<16x32xf32, #tpu.memory_space<vmem>>) attributes {dimension_semantics = [#tpu.dimension_semantics<parallel>, #tpu.dimension_semantics<arbitrary>], iteration_bounds = array<i64: 1, 1>, scalar_prefetch = 0 : i64, scratch_operands = 1 : i64, tpu.core_type = #tpu.core_type<tc>, window_params = [{transform_indices = @transform_0, window_bounds = array<i64: 16, 32>}, {transform_indices = @transform_1, window_bounds = array<i64: 32, 128>}, {transform_indices = @transform_2, window_bounds = array<i64: 1, 128>}, {transform_indices = @transform_3, window_bounds = array<i64: 128, 32>}, {pipeline_mode = #tpu.pipeline_mode<synchronous>, transform_indices = @transform_4, window_bounds = array<i64: 1, 32>}, {transform_indices = @transform_5, window_bounds = array<i64: 16, 32>}]} {
    %c0_i32 = arith.constant 0 : i32
    %0 = arith.cmpi eq, %arg1, %c0_i32 : i32
    %1 = arith.extui %0 : i1 to i32
    %c0_i32_0 = arith.constant 0 : i32
    %2 = arith.cmpi ne, %1, %c0_i32_0 : i32
    scf.if %2 {
      %cst_19 = arith.constant 0.000000e+00 : f32
      %30 = vector.broadcast %cst_19 : f32 to vector<16x32xf32>
      %c0_20 = arith.constant 0 : index
      %c0_21 = arith.constant 0 : index
      %31 = vector.load %arg8[%c0_20, %c0_21] : memref<16x32xf32, #tpu.memory_space<vmem>>, vector<16x32xf32>
      tpu.vector_store %arg8[%c0_20, %c0_21], %30 {strides = array<i32>} : memref<16x32xf32, #tpu.memory_space<vmem>>, vector<16x32xf32>,
    } else {
    }
    %c0 = arith.constant 0 : index
    %c0_1 = arith.constant 0 : index
    %3 = vector.load %arg2[%c0, %c0_1] : memref<16x32xf32, #tpu.memory_space<vmem>>, vector<16x32xf32>
    %c0_2 = arith.constant 0 : index
    %c0_3 = arith.constant 0 : index
    %4 = vector.load %arg3[%c0_2, %c0_3] : memref<32x128xf32, #tpu.memory_space<vmem>>, vector<32x128xf32>
    %cst = arith.constant dense<0.000000e+00> : vector<16x128xf32>
    %5 = tpu.matmul %3, %4, %cst {dimension_numbers = #tpu.dot_dimension_numbers<[1], [0], [0], [1], [0, 0, 1, 1], [], []>} : vector<16x32xf32>, vector<32x128xf32>, vector<16x128xf32> -> vector<16x128xf32>
    %c0_4 = arith.constant 0 : index
    %c0_5 = arith.constant 0 : index
    %6 = vector.load %arg4[%c0_4, %c0_5] : memref<1x128xf32, #tpu.memory_space<vmem>>, vector<1x128xf32>
    %7 = vector.broadcast %6 : vector<1x128xf32> to vector<16x128xf32>
    %8 = arith.addf %5, %7 : vector<16x128xf32>
    %cst_6 = arith.constant 5.000000e-01 : f32
    %9 = vector.broadcast %cst_6 : f32 to vector<16x128xf32>
    %10 = arith.mulf %9, %8 : vector<16x128xf32>
    %11 = arith.mulf %8, %8 : vector<16x128xf32>
    %12 = arith.mulf %11, %8 : vector<16x128xf32>
    %cst_7 = arith.constant 4.471500e-02 : f32
    %13 = vector.broadcast %cst_7 : f32 to vector<16x128xf32>
    %14 = arith.mulf %13, %12 : vector<16x128xf32>
    %15 = arith.addf %8, %14 : vector<16x128xf32>
    %cst_8 = arith.constant 0.797884583 : f32
    %16 = vector.broadcast %cst_8 : f32 to vector<16x128xf32>
    %17 = arith.mulf %16, %15 : vector<16x128xf32>
    %18 = math.tanh %17 : vector<16x128xf32>
    %cst_9 = arith.constant 1.000000e+00 : f32
    %19 = vector.broadcast %cst_9 : f32 to vector<16x128xf32>
    %20 = arith.addf %19, %18 : vector<16x128xf32>
    %21 = arith.mulf %10, %20 : vector<16x128xf32>
    %c0_10 = arith.constant 0 : index
    %c0_11 = arith.constant 0 : index
    %22 = vector.load %arg8[%c0_10, %c0_11] : memref<16x32xf32, #tpu.memory_space<vmem>>, vector<16x32xf32>
    %c0_12 = arith.constant 0 : index
    %c0_13 = arith.constant 0 : index
    %23 = vector.load %arg5[%c0_12, %c0_13] : memref<128x32xf32, #tpu.memory_space<vmem>>, vector<128x32xf32>
    %cst_14 = arith.constant dense<0.000000e+00> : vector<16x32xf32>
    %24 = tpu.matmul %21, %23, %cst_14 {dimension_numbers = #tpu.dot_dimension_numbers<[1], [0], [0], [1], [0, 0, 1, 1], [], []>} : vector<16x128xf32>, vector<128x32xf32>, vector<16x32xf32> -> vector<16x32xf32>
    %25 = arith.addf %22, %24 : vector<16x32xf32>
    %c0_15 = arith.constant 0 : index
    %c0_16 = arith.constant 0 : index
    %26 = vector.load %arg8[%c0_15, %c0_16] : memref<16x32xf32, #tpu.memory_space<vmem>>, vector<16x32xf32>
    tpu.vector_store %arg8[%c0_15, %c0_16], %25 {strides = array<i32>} : memref<16x32xf32, #tpu.memory_space<vmem>>, vector<16x32xf32>,
    %c0_i32_17 = arith.constant 0 : i32
    %27 = arith.cmpi eq, %arg1, %c0_i32_17 : i32
    %28 = arith.extui %27 : i1 to i32
    %c0_i32_18 = arith.constant 0 : i32
    %29 = arith.cmpi ne, %28, %c0_i32_18 : i32
    scf.if %29 {
      %c0_19 = arith.constant 0 : index
      %c0_20 = arith.constant 0 : index
      %30 = vector.load %arg8[%c0_19, %c0_20] : memref<16x32xf32, #tpu.memory_space<vmem>>, vector<16x32xf32>
      %c0_21 = arith.constant 0 : index
      %c0_22 = arith.constant 0 : index
      %31 = vector.load %arg6[%c0_21, %c0_22] : memref<1x32xf32, #tpu.memory_space<vmem>>, vector<1x32xf32>
      %32 = vector.broadcast %31 : vector<1x32xf32> to vector<16x32xf32>
      %33 = arith.addf %30, %32 : vector<16x32xf32>
      %c0_23 = arith.constant 0 : index
      %c0_24 = arith.constant 0 : index
      %34 = vector.load %arg7[%c0_23, %c0_24] : memref<16x32xf32, #tpu.memory_space<vmem>>, vector<16x32xf32>
      tpu.vector_store %arg7[%c0_23, %c0_24], %33 {strides = array<i32>} : memref<16x32xf32, #tpu.memory_space<vmem>>, vector<16x32xf32>,
    } else {
    }
    return
  }
  func.func @transform_0(%arg0: i32, %arg1: i32) -> (i32, i32) {
    %c0_i32 = arith.constant 0 : i32
    %c0_i32_0 = arith.constant 0 : i32
    return %arg0, %c0_i32 : i32, i32
  }
  func.func @transform_1(%arg0: i32, %arg1: i32) -> (i32, i32) {
    %c0_i32 = arith.constant 0 : i32
    %c0_i32_0 = arith.constant 0 : i32
    return %c0_i32, %arg1 : i32, i32
  }
  func.func @transform_2(%arg0: i32, %arg1: i32) -> (i32, i32) {
    %c0_i32 = arith.constant 0 : i32
    %c0_i32_0 = arith.constant 0 : i32
    return %c0_i32, %arg1 : i32, i32
  }
  func.func @transform_3(%arg0: i32, %arg1: i32) -> (i32, i32) {
    %c0_i32 = arith.constant 0 : i32
    %c0_i32_0 = arith.constant 0 : i32
    return %arg1, %c0_i32 : i32, i32
  }
  func.func @transform_4(%arg0: i32, %arg1: i32) -> (i32, i32) {
    %c0_i32 = arith.constant 0 : i32
    %c0_i32_0 = arith.constant 0 : i32
    %c0_i32_1 = arith.constant 0 : i32
    return %c0_i32, %c0_i32_0 : i32, i32
  }
  func.func @transform_5(%arg0: i32, %arg1: i32) -> (i32, i32) {
    %c0_i32 = arith.constant 0 : i32
    %c0_i32_0 = arith.constant 0 : i32
    return %arg0, %c0_i32 : i32, i32
  }
}

</mosaic_0001>

<llo_original>
// kernel: tpu_custom_call.1
$region0: #{tpu_custom_call.1}
  #allocation0 [shape = 'u32[]', space=smem, size = 0x4, offset = 0x4, fixed_abs, tag = 'smem constant byte address 0x4 - core index']
  #allocation1 [shape = 'u32[144,128]{1,0:T(1,128)}', space=vmem, size = 0x12000, scoped, tag = 'internal scratch']
  #allocation2 [shape = 'f32[16,32]{1,0:T(8,128)}', space=vmem, size = 0x2000, scoped, tag = 'scratch operand']
  %s0 = inlined_call_operand.vmem [shape: f32[16,32], index: 0, kind: input, shape index: {}]
  %s1 = inlined_call_operand.vmem [shape: f32[32,128], index: 1, kind: input, shape index: {}]
  %s2 = inlined_call_operand.vmem [shape: f32[1,128], index: 2, kind: input, shape index: {}]
  %s3 = inlined_call_operand.vmem [shape: f32[128,32], index: 3, kind: input, shape index: {}]
  %s4 = inlined_call_operand.vmem [shape: f32[1,32], index: 4, kind: input, shape index: {}]
  %s5 = inlined_call_operand.hbm [shape: f32[16,32], index: 5, kind: output, shape index: {}]
  %s6 = sld [smem:[#allocation0]]
  $region38: #{tpu_custom_call.1} parent=0
    _
  %s8 = ssub.s32 1, %s6
  %s9 = scalar_select 0, %s8, %s6
  $region1: #{tpu_custom_call.1} parent=0
    #allocation3 [shape = 'u8[8192]{0}', space=vmem, size = 0x2000, scoped, tag = 'output window, operand 0, single buffered']
    #allocation4 [shape = 's32[1]{0}', space=sflag, size = 0x4, scoped, tag = 'scoped memory for tpu_custom_call.1']
    %10 = vsyncpa [#allocation4], 0
    // Predicated region
    $region2: #{tpu_custom_call.1} parent=1 // pred_check
      _
    $region3: #{tpu_custom_call.1} parent=1 // pred_check_branch
      %12 = sbr.rel (0) target = $region5
    $region4: #{tpu_custom_call.1} parent=1 // pred_region
      _
    $region5: #{tpu_custom_call.1} parent=1 // pred_fallthru
      _
    // Predicated region
    $region6: #{tpu_custom_call.1} parent=1 // pred_check
      _
    $region7: #{tpu_custom_call.1} parent=1 // pred_check_branch
      %14 = sbr.rel (0) target = $region9
    $region8: #{tpu_custom_call.1} parent=1 // pred_region
      _
    $region9: #{tpu_custom_call.1} parent=1 // pred_fallthru
      _
    // Predicated region
    $region10: #{tpu_custom_call.1} parent=1 // pred_check
      _
    $region11: #{tpu_custom_call.1} parent=1 // pred_check_branch
      %16 = sbr.rel (0) target = $region13
    $region12: #{tpu_custom_call.1} parent=1 // pred_region
      _
    $region13: #{tpu_custom_call.1} parent=1 // pred_fallthru
      _
    // Predicated region
    $region14: #{tpu_custom_call.1} parent=1 // pred_check
      _
    $region15: #{tpu_custom_call.1} parent=1 // pred_check_branch
      %18 = sbr.rel (0) target = $region17
    $region16: #{tpu_custom_call.1} parent=1 // pred_region
      _
    $region17: #{tpu_custom_call.1} parent=1 // pred_fallthru
      _
    // Predicated region
    $region18: #{tpu_custom_call.1} parent=1 // pred_check
      _
    $region19: #{tpu_custom_call.1} parent=1 // pred_check_branch
      %20 = sbr.rel (0) target = $region21
    $region20: #{tpu_custom_call.1} parent=1 // pred_region
      _
    $region21: #{tpu_custom_call.1} parent=1 // pred_fallthru
      _
    %p21 = scmp.eq.s32.totalorder 0, 0
    // Predicated region
    $region22: #{tpu_custom_call.1} parent=1 // pred_check
      %p22 = pneg %p21
    $region23: #{tpu_custom_call.1} parent=1 // pred_check_branch
      %24 = sbr.rel (%p22) target = $region25
    $region24: #{tpu_custom_call.1} parent=1 // pred_region
      %vm25 = vcmask 261120
      %26 = vst.msk [vmem:[#allocation2] sm:$0xff] %vm25, 0.0
      %27 = vst.msk [vmem:[#allocation2 + $0x8] sm:$0xff] %vm25, 0.0
    $region25: #{tpu_custom_call.1} parent=1 // pred_fallthru
      _
    %v28 = vld [vmem:[%s0] sm:$0xff]
    %v29 = vld [vmem:[%s0 + $0x8] sm:$0xff]
    %v30 = vld [vmem:[%s1] sm:$0xff]
    %v31 = vld [vmem:[%s1 + $0x8] sm:$0xff]
    %v32 = vld [vmem:[%s1 + $0x10] sm:$0xff]
    %v33 = vld [vmem:[%s1 + $0x18] sm:$0xff]
    %v34 = vld [vmem:[%s2] sm:$0x1]
    %v36 = vlaneseq
    %v37 = vshrl.u32 %v36, 7
    %v38 = vsub.s32 0, %v37
    %v39 = vrot.slane %v34, %v38
    %vm41 = vcmask 261120
    %v43 = vsel %vm41, %v28, 0
    %v46 = vsel %vm41, %v29, 0
    %48 = vmatprep.subr.mxu0 0.0
    %49 = vmatpush1.msra.mxu0 0.0
    %50 = vmatprep.subr.mxu0 0.0
    %51 = vmatpush1.msra.mxu0 0.0
    %52 = vmatprep.subr.mxu0 0.0
    %53 = vmatpush1.msra.mxu0 0.0
    %54 = vmatprep.subr.mxu0 0.0
    %55 = vmatpush1.msra.mxu0 0.0
    %56 = vmatprep.subr.mxu0 0.0
    %57 = vmatpush1.msra.mxu0 0.0
    %58 = vmatprep.subr.mxu0 0.0
    %59 = vmatpush1.msra.mxu0 0.0
    %60 = vmatprep.subr.mxu0 0.0
    %61 = vmatpush1.msra.mxu0 0.0
    %62 = vmatprep.subr.mxu0 0.0
    %63 = vmatpush1.msra.mxu0 0.0
    %64 = vmatprep.subr.mxu0 0.0
    %65 = vmatpush1.msra.mxu0 0.0
    %66 = vmatprep.subr.mxu0 0.0
    %67 = vmatpush1.msra.mxu0 0.0
    %68 = vmatprep.subr.mxu0 0.0
    %69 = vmatpush1.msra.mxu0 0.0
    %70 = vmatprep.subr.mxu0 0.0
    %71 = vmatpush1.msra.mxu0 0.0
    %72 = vmatprep.subr.mxu0 0.0
    %73 = vmatpush1.msra.mxu0 %v33
    %74 = vmatprep.subr.mxu0 0.0
    %75 = vmatpush1.msra.mxu0 %v32
    %76 = vmatprep.subr.mxu0 0.0
    %77 = vmatpush1.msra.mxu0 %v31
    %78 = vmatprep.subr.mxu0 0.0
    %79 = vmatpush1.msra.mxu0 %v30
    %80 = vmatprep.subr.mxu0 0.0
    %81 = vmatpush2.msra.mxu0 0.0
    %82 = vmatprep.subr.mxu0 0.0
    %83 = vmatpush2.msra.mxu0 0.0
    %84 = vmatprep.subr.mxu0 0.0
    %85 = vmatpush2.msra.mxu0 0.0
    %86 = vmatprep.subr.mxu0 0.0
    %87 = vmatpush2.msra.mxu0 0.0
    %88 = vmatprep.subr.mxu0 0.0
    %89 = vmatpush2.msra.mxu0 0.0
    %90 = vmatprep.subr.mxu0 0.0
    %91 = vmatpush2.msra.mxu0 0.0
    %92 = vmatprep.subr.mxu0 0.0
    %93 = vmatpush2.msra.mxu0 0.0
    %94 = vmatprep.subr.mxu0 0.0
    %95 = vmatpush2.msra.mxu0 0.0
    %96 = vmatprep.subr.mxu0 0.0
    %97 = vmatpush2.msra.mxu0 0.0
    %98 = vmatprep.subr.mxu0 0.0
    %99 = vmatpush2.msra.mxu0 0.0
    %100 = vmatprep.subr.mxu0 0.0
    %101 = vmatpush2.msra.mxu0 0.0
    %102 = vmatprep.subr.mxu0 0.0
    %103 = vmatpush2.msra.mxu0 0.0
    %104 = vmatprep.subr.mxu0 0.0
    %105 = vmatpush2.msra.mxu0 0.0
    %106 = vmatprep.subr.mxu0 0.0
    %107 = vmatpush2.msra.mxu0 0.0
    %108 = vmatprep.subr.mxu0 0.0
    %109 = vmatpush2.msra.mxu0 0.0
    %110 = vmatprep.subr.mxu0 0.0
    %111 = vmatpush2.msra.mxu0 0.0
    %112 = vmatprep.mubr.f32.mxu0 0.0
    %113 = vmatmul.mubr.f32.gmra.mxu0 %v43
    %v114 = vpop.f32.mrf.mxu0
    %v115 = vadd.f32 %v39, %v114
    %v116 = vpop.f32.mrf.mxu0
    %117 = vmatprep.mubr.f32.mxu0 0.0
    %118 = vmatmul.mubr.f32.gmra.mxu0 %v46
    %v119 = vpop.f32.mrf.mxu0
    %v120 = vadd.f32 %v39, %v119
    %v121 = vpop.f32.mrf.mxu0
    %122 = vdwg.mxu0
    %v123 = vmul.f32 %v115, 0.5
    %v124 = vmul.f32 %v120, 0.5
    %v125 = vmul.f32 %v115, %v115
    %v126 = vmul.f32 %v120, %v120
    %v127 = vmul.f32 %v125, %v115
    %v128 = vmul.f32 %v126, %v120
    %v129 = vmul.f32 %v127, 0.044715
    %v130 = vmul.f32 %v128, 0.044715
    %v131 = vadd.f32 %v115, %v129
    %v132 = vadd.f32 %v120, %v130
    %v133 = vmul.f32 %v131, 0.7978846
    %v134 = vmul.f32 %v132, 0.7978846
    %v135 = vtanh.pop %v133
    %v136 = vtanh.pop %v134
    %v137 = vadd.f32 %v135, 1.0
    %v138 = vadd.f32 %v136, 1.0
    %v139 = vmul.f32 %v123, %v137
    %v140 = vmul.f32 %v124, %v138
    %v141 = vld [vmem:[#allocation2] sm:$0xff]
    %v142 = vld [vmem:[#allocation2 + $0x8] sm:$0xff]
    %v143 = vld [vmem:[%s3] sm:$0xff]
    %v144 = vld [vmem:[%s3 + $0x8] sm:$0xff]
    %v145 = vld [vmem:[%s3 + $0x10] sm:$0xff]
    %v146 = vld [vmem:[%s3 + $0x18] sm:$0xff]
    %v147 = vld [vmem:[%s3 + $0x20] sm:$0xff]
    %v148 = vld [vmem:[%s3 + $0x28] sm:$0xff]
    %v149 = vld [vmem:[%s3 + $0x30] sm:$0xff]
    %v150 = vld [vmem:[%s3 + $0x38] sm:$0xff]
    %v151 = vld [vmem:[%s3 + $0x40] sm:$0xff]
    %v152 = vld [vmem:[%s3 + $0x48] sm:$0xff]
    %v153 = vld [vmem:[%s3 + $0x50] sm:$0xff]
    %v154 = vld [vmem:[%s3 + $0x58] sm:$0xff]
    %v155 = vld [vmem:[%s3 + $0x60] sm:$0xff]
    %v156 = vld [vmem:[%s3 + $0x68] sm:$0xff]
    %v157 = vld [vmem:[%s3 + $0x70] sm:$0xff]
    %v158 = vld [vmem:[%s3 + $0x78] sm:$0xff]
    %159 = vmatprep.subr.mxu0 0.0
    %160 = vmatpush1.msra.mxu0 %v158
    %161 = vmatprep.subr.mxu0 0.0
    %162 = vmatpush1.msra.mxu0 %v157
    %163 = vmatprep.subr.mxu0 0.0
    %164 = vmatpush1.msra.mxu0 %v156
    %165 = vmatprep.subr.mxu0 0.0
    %166 = vmatpush1.msra.mxu0 %v155
    %167 = vmatprep.subr.mxu0 0.0
    %168 = vmatpush1.msra.mxu0 %v154
    %169 = vmatprep.subr.mxu0 0.0
    %170 = vmatpush1.msra.mxu0 %v153
    %171 = vmatprep.subr.mxu0 0.0
    %172 = vmatpush1.msra.mxu0 %v152
    %173 = vmatprep.subr.mxu0 0.0
    %174 = vmatpush1.msra.mxu0 %v151
    %175 = vmatprep.subr.mxu0 0.0
    %176 = vmatpush1.msra.mxu0 %v150
    %177 = vmatprep.subr.mxu0 0.0
    %178 = vmatpush1.msra.mxu0 %v149
    %179 = vmatprep.subr.mxu0 0.0
    %180 = vmatpush1.msra.mxu0 %v148
    %181 = vmatprep.subr.mxu0 0.0
    %182 = vmatpush1.msra.mxu0 %v147
    %183 = vmatprep.subr.mxu0 0.0
    %184 = vmatpush1.msra.mxu0 %v146
    %185 = vmatprep.subr.mxu0 0.0
    %186 = vmatpush1.msra.mxu0 %v145
    %187 = vmatprep.subr.mxu0 0.0
    %188 = vmatpush1.msra.mxu0 %v144
    %189 = vmatprep.subr.mxu0 0.0
    %190 = vmatpush1.msra.mxu0 %v143
    %191 = vmatprep.subr.mxu0 0.0
    %192 = vmatpush2.msra.mxu0 0.0
    %193 = vmatprep.subr.mxu0 0.0
    %194 = vmatpush2.msra.mxu0 0.0
    %195 = vmatprep.subr.mxu0 0.0
    %196 = vmatpush2.msra.mxu0 0.0
    %197 = vmatprep.subr.mxu0 0.0
    %198 = vmatpush2.msra.mxu0 0.0
    %199 = vmatprep.subr.mxu0 0.0
    %200 = vmatpush2.msra.mxu0 0.0
    %201 = vmatprep.subr.mxu0 0.0
    %202 = vmatpush2.msra.mxu0 0.0
    %203 = vmatprep.subr.mxu0 0.0
    %204 = vmatpush2.msra.mxu0 0.0
    %205 = vmatprep.subr.mxu0 0.0
    %206 = vmatpush2.msra.mxu0 0.0
    %207 = vmatprep.subr.mxu0 0.0
    %208 = vmatpush2.msra.mxu0 0.0
    %209 = vmatprep.subr.mxu0 0.0
    %210 = vmatpush2.msra.mxu0 0.0
    %211 = vmatprep.subr.mxu0 0.0
    %212 = vmatpush2.msra.mxu0 0.0
    %213 = vmatprep.subr.mxu0 0.0
    %214 = vmatpush2.msra.mxu0 0.0
    %215 = vmatprep.subr.mxu0 0.0
    %216 = vmatpush2.msra.mxu0 0.0
    %217 = vmatprep.subr.mxu0 0.0
    %218 = vmatpush2.msra.mxu0 0.0
    %219 = vmatprep.subr.mxu0 0.0
    %220 = vmatpush2.msra.mxu0 0.0
    %221 = vmatprep.subr.mxu0 0.0
    %222 = vmatpush2.msra.mxu0 0.0
    %223 = vmatprep.mubr.f32.mxu0 0.0
    %224 = vmatmul.mubr.f32.gmra.mxu0 %v139
    %v225 = vpop.f32.mrf.mxu0
    %v226 = vadd.f32 0.0, %v225
    %v227 = vpop.f32.mrf.mxu0
    %228 = vmatprep.mubr.f32.mxu0 0.0
    %229 = vmatmul.mubr.f32.gmra.mxu0 %v140
    %v230 = vpop.f32.mrf.mxu0
    %v231 = vadd.f32 0.0, %v230
    %v232 = vpop.f32.mrf.mxu0
    %233 = vdwg.mxu0
    %v234 = vadd.f32 %v141, %v226
    %v235 = vadd.f32 %v142, %v231
    %236 = vst.msk [vmem:[#allocation2] sm:$0xff] %vm41, %v234
    %237 = vst.msk [vmem:[#allocation2 + $0x8] sm:$0xff] %vm41, %v235
    // Predicated region
    $region26: #{tpu_custom_call.1} parent=1 // pred_check
      %p238 = pneg %p21
    $region27: #{tpu_custom_call.1} parent=1 // pred_check_branch
      %240 = sbr.rel (%p238) target = $region29
    $region28: #{tpu_custom_call.1} parent=1 // pred_region
      %v241 = vld [vmem:[#allocation2] sm:$0xff]
      %v242 = vld [vmem:[#allocation2 + $0x8] sm:$0xff]
      %v243 = vld [vmem:[%s4] sm:$0x1]
      %v245 = vlaneseq
      %v246 = vshrl.u32 %v245, 7
      %v247 = vsub.s32 0, %v246
      %v248 = vrot.slane %v243, %v247
      %v250 = vadd.f32 %v241, %v248
      %v251 = vadd.f32 %v242, %v248
      %252 = vst.msk [vmem:[#allocation3] sm:$0xff] %vm41, %v250
      %253 = vst.msk [vmem:[#allocation3 + $0x8] sm:$0xff] %vm41, %v251
    $region29: #{tpu_custom_call.1} parent=1 // pred_fallthru
      _
    // Predicated region
    $region30: #{tpu_custom_call.1} parent=1 // pred_check
      _
    $region31: #{tpu_custom_call.1} parent=1 // pred_check_branch
      %255 = sbr.rel (0) target = $region33
    $region32: #{tpu_custom_call.1} parent=1 // pred_region
      %s257 = ssub.s32 256, 256
      %258 = vsyncadd [#allocation4], %s257
      %s259 = sshll.u32 [#allocation3], 4
      %s260 = int_to_ptr.vmem [resolvable:$true] %s259
      %265 = dma.vmem_to_hbm [thread:$0]  %s260, 256, %s5, [#allocation4], 128, 128, 8
    $region33: #{tpu_custom_call.1} parent=1 // pred_fallthru
      _
    // Predicated region
    $region34: #{tpu_custom_call.1} parent=1 // pred_check
      _
    $region35: #{tpu_custom_call.1} parent=1 // pred_check_branch
      %267 = sbr.rel (0) target = $region37
    $region36: #{tpu_custom_call.1} parent=1 // pred_region
      %268 = dma.done [#allocation4], 256
    $region37: #{tpu_custom_call.1} parent=1 // pred_fallthru
      _
    %269 = vsyncpa [#allocation4], 1

</llo_original>
